<compile_context>
chip_gen: v7x
topology: tpu7x:2x2x1
jax: 0.10.0
libtpu: 0.0.40
codegen_flags: <defaults>
</compile_context>

<pallas_src>
import functools

import jax
import jax.numpy as jnp
from jax.experimental import pallas as pl
from jax.experimental.pallas import tpu as pltpu


_TP = 128  # point-tile width (lane-dense; matches MXU N geometry on all chips)


def _round_up(n, m):
    return ((n + m - 1) // m) * m


# ----------------------------------------------------------------------------
# In-kernel helper: factorized bilinear sampling of an (nc*H, W) map at a tile
# of points given in transposed layout (2, TP): row 0 = x (width), row 1 = y,
# both normalized to [0, 1] (grid_sample, align_corners=False, zero padding).
# Returns (nc, TP).
# ----------------------------------------------------------------------------
def _sample_proj(proj2, pts_t, H, W, nc):
    tp = pts_t.shape[-1]
    px = pts_t[0:1, :] * W - 0.5            # (1, TP)   x -> width
    py = pts_t[1:2, :] * H - 0.5            # (1, TP)   y -> height
    x0 = jnp.floor(px)
    y0 = jnp.floor(py)
    fx = px - x0
    fy = py - y0
    x0i = x0.astype(jnp.int32)
    y0i = y0.astype(jnp.int32)

    # Factorized weight build: only (W, TP) + (H, TP) elements touched,
    # no iota over H*W, no integer div/mod.
    iw = jax.lax.broadcasted_iota(jnp.int32, (W, tp), 0)
    ih = jax.lax.broadcasted_iota(jnp.int32, (H, tp), 0)
    # out-of-range corners never match an in-range index -> zero padding
    wx = jnp.where(iw == x0i, 1.0 - fx, jnp.where(iw == x0i + 1, fx, 0.0))  # (W, TP)
    wy = jnp.where(ih == y0i, 1.0 - fy, jnp.where(ih == y0i + 1, fy, 0.0))  # (H, TP)

    # stage 1: MXU contraction over W  ->  (nc*H, TP)
    a = jax.lax.dot_general(
        proj2, wx, (((1,), (0,)), ((), ())),
        preferred_element_type=jnp.float32)

    # stage 2: per-class weighted sublane reduction over H (VPU + reduce)
    rows = []
    for c in range(nc):
        blk = a[c * H:(c + 1) * H, :] * wy                 # (H, TP)
        rows.append(jnp.sum(blk, axis=0, keepdims=True))   # (1, TP)
    return jnp.concatenate(rows, axis=0)                   # (nc, TP)


# ----------------------------------------------------------------------------
# Kernel 1: fused PointHead hot path on projected (nc-channel) maps
#   rend = sample(W_c @ out) + sample(W_f @ res2) + b
# ----------------------------------------------------------------------------
def _rend_kernel(pc_ref, pf_ref, pts_ref, b_ref, o_ref, *, Hc, Wc, Hf, Wf, nc):
    pts_t = pts_ref[0]                                     # (2, TP)
    coarse = _sample_proj(pc_ref[0], pts_t, Hc, Wc, nc)    # (nc, TP)
    fine = _sample_proj(pf_ref[0], pts_t, Hf, Wf, nc)      # (nc, TP)
    o_ref[0] = (coarse + fine + b_ref[...]).astype(o_ref.dtype)


def pointhead_rend_pallas(out, res2, points, mlp_w, mlp_b):
    """out: (B, Cc, Hc, Wc), res2: (B, Cf, Hf, Wf), points: (B, P, 2) in [0,1],
    mlp_w: (nc, Cc+Cf), mlp_b: (nc,)  ->  rend: (B, nc, P)."""
    B, Cc, Hc, Wc = out.shape
    _, Cf, Hf, Wf = res2.shape
    P = points.shape[1]
    nc, in_c = mlp_w.shape
    assert in_c == Cc + Cf

    # Linear head commutes with bilinear sampling: project channels first.
    w_c = mlp_w[:, :Cc]                                    # concat order [coarse, fine]
    w_f = mlp_w[:, Cc:]
    proj_c = jnp.einsum("oc,bchw->bohw", w_c, out,
                        precision=jax.lax.Precision.HIGHEST)
    proj_f = jnp.einsum("oc,bchw->bohw", w_f, res2,
                        precision=jax.lax.Precision.HIGHEST)
    proj_c = proj_c.reshape(B, nc * Hc, Wc)
    proj_f = proj_f.reshape(B, nc * Hf, Wf)

    p_pad = _round_up(max(P, 1), _TP)
    pts_t = jnp.transpose(
        jnp.pad(points, ((0, 0), (0, p_pad - P), (0, 0))), (0, 2, 1))  # (B, 2, P_pad)
    b2d = mlp_b.reshape(nc, 1)

    n_pt = p_pad // _TP
    kernel = functools.partial(_rend_kernel, Hc=Hc, Wc=Wc, Hf=Hf, Wf=Wf, nc=nc)
    flops = 2 * B * p_pad * nc * (Hc * Wc + Hf * Wf + Hc + Hf)
    bytes_accessed = 4 * (proj_c.size + proj_f.size + pts_t.size + B * nc * p_pad)

    rend = pl.pallas_call(
        kernel,
        out_shape=jax.ShapeDtypeStruct((B, nc, p_pad), jnp.float32),
        grid=(B, n_pt),
        in_specs=[
            pl.BlockSpec((1, nc * Hc, Wc), lambda b, p: (b, 0, 0)),
            pl.BlockSpec((1, nc * Hf, Wf), lambda b, p: (b, 0, 0)),
            pl.BlockSpec((1, 2, _TP), lambda b, p: (b, 0, p)),
            pl.BlockSpec((nc, 1), lambda b, p: (0, 0)),
        ],
        out_specs=pl.BlockSpec((1, nc, _TP), lambda b, p: (b, 0, p)),
        compiler_params=pltpu.CompilerParams(
            dimension_semantics=("parallel", "parallel")),
        cost_estimate=pl.CostEstimate(
            flops=flops, transcendentals=0, bytes_accessed=bytes_accessed),
    )(proj_c, proj_f, pts_t, b2d)
    return rend[:, :, :P]


# ----------------------------------------------------------------------------
# Kernel 2: fused uncertainty = -(top1 - top2) of the bilinearly sampled
# top-2 per-pixel class maps (used by sampling_points).
# ----------------------------------------------------------------------------
def _uncertainty_kernel(map_ref, pts_ref, o_ref, *, H, W):
    pts_t = pts_ref[0]                                     # (2, TP)
    v = _sample_proj(map_ref[0], pts_t, H, W, 2)           # (2, TP): top1, top2
    o_ref[0] = v[1:2, :] - v[0:1, :]                       # -(top1 - top2)


def uncertainty_pallas(top2, points):
    """top2: (B, 2, H, W) descending top-2 maps, points: (B, P, 2) -> (B, P)."""
    B, two, H, W = top2.shape
    P = points.shape[1]
    p_pad = _round_up(max(P, 1), _TP)
    pts_t = jnp.transpose(
        jnp.pad(points, ((0, 0), (0, p_pad - P), (0, 0))), (0, 2, 1))
    maps2 = top2.reshape(B, two * H, W)

    kernel = functools.partial(_uncertainty_kernel, H=H, W=W)
    unc = pl.pallas_call(
        kernel,
        out_shape=jax.ShapeDtypeStruct((B, 1, p_pad), jnp.float32),
        grid=(B, p_pad // _TP),
        in_specs=[
            pl.BlockSpec((1, two * H, W), lambda b, p: (b, 0, 0)),
            pl.BlockSpec((1, 2, _TP), lambda b, p: (b, 0, p)),
        ],
        out_specs=pl.BlockSpec((1, 1, _TP), lambda b, p: (b, 0, p)),
        compiler_params=pltpu.CompilerParams(
            dimension_semantics=("parallel", "parallel")),
    )(maps2, pts_t)
    return unc[:, 0, :P]


# ----------------------------------------------------------------------------
# sampling_points (PointRend training-time point selection) -- plain-JAX glue
# (RNG / top_k / gather); uncertainty estimation runs in the Pallas kernel.
# ----------------------------------------------------------------------------
def sampling_points(mask, N, k, beta, key):
    B, C, H, W = mask.shape
    # Only the two largest per-pixel class scores matter for the uncertainty.
    top2 = jax.lax.top_k(jnp.transpose(mask, (0, 2, 3, 1)), 2)[0]  # (B, H, W, 2)
    top2 = jnp.transpose(top2, (0, 3, 1, 2))                       # (B, 2, H, W)

    k1, k2 = jax.random.split(key)
    over_gen = jax.random.uniform(k1, (B, k * N, 2), dtype=jnp.float32)
    uncertainty = uncertainty_pallas(top2, over_gen)               # (B, k*N)

    n_imp = int(beta * N)
    _, idx = jax.lax.top_k(uncertainty, n_imp)                     # (B, n_imp)
    importance = jnp.take_along_axis(over_gen, idx[..., None], axis=1)
    coverage = jax.random.uniform(k2, (B, N - n_imp, 2), dtype=jnp.float32)
    return jnp.concatenate([importance, coverage], axis=1)         # (B, N, 2)


def point_head_forward(x, res2, out, mlp_w, mlp_b, *, k=3, beta=0.75, key=None):
    N = x.shape[-1] // 16
    points = sampling_points(out, N, k, beta, key)
    rend = pointhead_rend_pallas(out, res2, points, mlp_w, mlp_b)
    return {"rend": rend, "points": points}


# ----------------------------------------------------------------------------
# Pure-JAX reference (numerical sanity check; gather-based, f32-accurate)
# ----------------------------------------------------------------------------
def point_sample_ref(feat, pts):
    B, C, H, W = feat.shape
    px = pts[..., 0] * W - 0.5
    py = pts[..., 1] * H - 0.5
    x0 = jnp.floor(px).astype(jnp.int32)
    y0 = jnp.floor(py).astype(jnp.int32)
    fx = (px - x0)[:, None, :]
    fy = (py - y0)[:, None, :]
    feat_flat = feat.reshape(B, C, H * W)
    P = pts.shape[1]

    def gather(xi, yi):
        valid = ((xi >= 0) & (xi < W) & (yi >= 0) & (yi < H)).astype(feat.dtype)
        xc = jnp.clip(xi, 0, W - 1)
        yc = jnp.clip(yi, 0, H - 1)
        flat = jnp.broadcast_to((yc * W + xc)[:, None, :], (B, C, P))
        return jnp.take_along_axis(feat_flat, flat, axis=2) * valid[:, None, :]

    v00 = gather(x0, y0)
    v10 = gather(x0 + 1, y0)
    v01 = gather(x0, y0 + 1)
    v11 = gather(x0 + 1, y0 + 1)
    return (v00 * (1 - fx) * (1 - fy) + v10 * fx * (1 - fy)
            + v01 * (1 - fx) * fy + v11 * fx * fy)


def rend_ref(out, res2, points, mlp_w, mlp_b):
    coarse = point_sample_ref(out, points)
    fine = point_sample_ref(res2, points)
    feat = jnp.concatenate([coarse, fine], axis=1)               # (B, in_c, P)
    return (jnp.einsum("oc,bcp->bop", mlp_w, feat,
                       precision=jax.lax.Precision.HIGHEST)
            + mlp_b[None, :, None])


# ----------------------------------------------------------------------------
if __name__ == "__main__":
    key = jax.random.PRNGKey(0)
    kx, kr, ko, kw, kb, kp = jax.random.split(key, 6)

    # small, self-consistent shapes
    B = 2
    num_classes = 2
    Cf = 30                      # fine-feature channels -> in_c = 32
    in_c = num_classes + Cf
    x = jax.random.normal(kx, (B, 3, 64, 64), dtype=jnp.float32)          # input image
    res2 = jax.random.normal(kr, (B, Cf, 16, 16), dtype=jnp.float32)      # fine features
    out = jax.random.normal(ko, (B, num_classes, 8, 8), dtype=jnp.float32)  # coarse pred

    # deterministic "Conv1d(in_c, num_classes, 1)" parameters
    mlp_w = 0.1 * jax.random.normal(kw, (num_classes, in_c), dtype=jnp.float32)
    mlp_b = 0.05 * jax.random.normal(kb, (num_classes,), dtype=jnp.float32)

    result = point_head_forward(x, res2, out, mlp_w, mlp_b, k=3, beta=0.75, key=kp)
    rend = jax.block_until_ready(result["rend"])
    points = jax.block_until_ready(result["points"])

    # sanity check against a pure-JAX reference (same points).  Tolerance
    # accounts for the default (single-pass bf16) MXU precision used in the
    # kernel now that HIGHEST has been dropped.
    ref = rend_ref(out, res2, points, mlp_w, mlp_b)
    assert rend.shape == (B, num_classes, x.shape[-1] // 16)
    assert points.shape == (B, x.shape[-1] // 16, 2)
    assert jnp.allclose(rend, ref, atol=2e-2, rtol=2e-2), "mismatch vs reference"

    print("KERNEL_OK")
</pallas_src>

<mosaic_0001>
module attributes {stable_mosaic.version = 11 : i64} {
  func.func @_uncertainty_kernel(%arg0: i32, %arg1: i32, %arg2: memref<1x16x8xf32, #tpu.memory_space<vmem>>, %arg3: memref<1x2x128xf32, #tpu.memory_space<vmem>>, %arg4: memref<1x1x128xf32, #tpu.memory_space<vmem>>) attributes {dimension_semantics = [#tpu.dimension_semantics<parallel>, #tpu.dimension_semantics<parallel>], iteration_bounds = array<i64: 2, 1>, scalar_prefetch = 0 : i64, scratch_operands = 0 : i64, tpu.core_type = #tpu.core_type<tc>, window_params = [{transform_indices = @transform_0, window_bounds = array<i64: 1, 16, 8>}, {transform_indices = @transform_1, window_bounds = array<i64: 1, 2, 128>}, {transform_indices = @transform_2, window_bounds = array<i64: 1, 1, 128>}]} {
    %c0 = arith.constant 0 : index
    %c0_0 = arith.constant 0 : index
    %c0_1 = arith.constant 0 : index
    %0 = vector.load %arg3[%c0, %c0_0, %c0_1] : memref<1x2x128xf32, #tpu.memory_space<vmem>>, vector<1x2x128xf32>
    %1 = vector.shape_cast %0 : vector<1x2x128xf32> to vector<2x128xf32>
    %c0_2 = arith.constant 0 : index
    %c0_3 = arith.constant 0 : index
    %c0_4 = arith.constant 0 : index
    %2 = vector.load %arg2[%c0_2, %c0_3, %c0_4] : memref<1x16x8xf32, #tpu.memory_space<vmem>>, vector<1x16x8xf32>
    %3 = vector.shape_cast %2 : vector<1x16x8xf32> to vector<16x8xf32>
    %4 = vector.extract_strided_slice %1 {offsets = [0, 0], sizes = [1, 128], strides = [1, 1]} : vector<2x128xf32> to vector<1x128xf32>
    %cst = arith.constant 8.000000e+00 : f32
    %5 = vector.broadcast %cst : f32 to vector<1x128xf32>
    %6 = arith.mulf %4, %5 : vector<1x128xf32>
    %cst_5 = arith.constant 5.000000e-01 : f32
    %7 = vector.broadcast %cst_5 : f32 to vector<1x128xf32>
    %8 = arith.subf %6, %7 : vector<1x128xf32>
    %9 = vector.extract_strided_slice %1 {offsets = [1, 0], sizes = [1, 128], strides = [1, 1]} : vector<2x128xf32> to vector<1x128xf32>
    %cst_6 = arith.constant 8.000000e+00 : f32
    %10 = vector.broadcast %cst_6 : f32 to vector<1x128xf32>
    %11 = arith.mulf %9, %10 : vector<1x128xf32>
    %cst_7 = arith.constant 5.000000e-01 : f32
    %12 = vector.broadcast %cst_7 : f32 to vector<1x128xf32>
    %13 = arith.subf %11, %12 : vector<1x128xf32>
    %14 = math.floor %8 : vector<1x128xf32>
    %15 = math.floor %13 : vector<1x128xf32>
    %16 = arith.subf %8, %14 : vector<1x128xf32>
    %17 = arith.subf %13, %15 : vector<1x128xf32>
    %18 = arith.fptosi %14 : vector<1x128xf32> to vector<1x128xi32>
    %19 = arith.fptosi %15 : vector<1x128xf32> to vector<1x128xi32>
    %20 = tpu.iota {dimensions = array<i32: 0>} : vector<8x128xi32>
    %21 = tpu.iota {dimensions = array<i32: 0>} : vector<8x128xi32>
    %22 = vector.broadcast %18 : vector<1x128xi32> to vector<8x128xi32>
    %23 = arith.cmpi eq, %20, %22 : vector<8x128xi32>
    %cst_8 = arith.constant 1.000000e+00 : f32
    %24 = vector.broadcast %cst_8 : f32 to vector<1x128xf32>
    %25 = arith.subf %24, %16 : vector<1x128xf32>
    %c1_i32 = arith.constant 1 : i32
    %26 = vector.broadcast %c1_i32 : i32 to vector<1x128xi32>
    %27 = arith.addi %18, %26 : vector<1x128xi32>
    %28 = vector.broadcast %27 : vector<1x128xi32> to vector<8x128xi32>
    %29 = arith.cmpi eq, %20, %28 : vector<8x128xi32>
    %cst_9 = arith.constant 0.000000e+00 : f32
    %30 = vector.shape_cast %16 : vector<1x128xf32> to vector<1x128xf32>
    %31 = vector.broadcast %30 : vector<1x128xf32> to vector<8x128xf32>
    %32 = vector.broadcast %cst_9 : f32 to vector<8x128xf32>
    %33 = arith.select %29, %31, %32 : vector<8x128xi1>, vector<8x128xf32>
    %34 = vector.shape_cast %25 : vector<1x128xf32> to vector<1x128xf32>
    %35 = vector.broadcast %34 : vector<1x128xf32> to vector<8x128xf32>
    %36 = arith.select %23, %35, %33 : vector<8x128xi1>, vector<8x128xf32>
    %37 = vector.broadcast %19 : vector<1x128xi32> to vector<8x128xi32>
    %38 = arith.cmpi eq, %21, %37 : vector<8x128xi32>
    %cst_10 = arith.constant 1.000000e+00 : f32
    %39 = vector.broadcast %cst_10 : f32 to vector<1x128xf32>
    %40 = arith.subf %39, %17 : vector<1x128xf32>
    %c1_i32_11 = arith.constant 1 : i32
    %41 = vector.broadcast %c1_i32_11 : i32 to vector<1x128xi32>
    %42 = arith.addi %19, %41 : vector<1x128xi32>
    %43 = vector.broadcast %42 : vector<1x128xi32> to vector<8x128xi32>
    %44 = arith.cmpi eq, %21, %43 : vector<8x128xi32>
    %cst_12 = arith.constant 0.000000e+00 : f32
    %45 = vector.shape_cast %17 : vector<1x128xf32> to vector<1x128xf32>
    %46 = vector.broadcast %45 : vector<1x128xf32> to vector<8x128xf32>
    %47 = vector.broadcast %cst_12 : f32 to vector<8x128xf32>
    %48 = arith.select %44, %46, %47 : vector<8x128xi1>, vector<8x128xf32>
    %49 = vector.shape_cast %40 : vector<1x128xf32> to vector<1x128xf32>
    %50 = vector.broadcast %49 : vector<1x128xf32> to vector<8x128xf32>
    %51 = arith.select %38, %50, %48 : vector<8x128xi1>, vector<8x128xf32>
    %cst_13 = arith.constant dense<0.000000e+00> : vector<16x128xf32>
    %52 = tpu.matmul %3, %36, %cst_13 {dimension_numbers = #tpu.dot_dimension_numbers<[1], [0], [0], [1], [0, 0, 1, 1], [], []>} : vector<16x8xf32>, vector<8x128xf32>, vector<16x128xf32> -> vector<16x128xf32>
    %53 = vector.extract_strided_slice %52 {offsets = [0, 0], sizes = [8, 128], strides = [1, 1]} : vector<16x128xf32> to vector<8x128xf32>
    %54 = arith.mulf %53, %51 : vector<8x128xf32>
    %cst_14 = arith.constant dense<0.000000e+00> : vector<128xf32>
    %55 = vector.multi_reduction <add>, %54, %cst_14 [0] : vector<8x128xf32> to vector<128xf32>
    %56 = vector.shape_cast %55 : vector<128xf32> to vector<1x128xf32>
    %57 = vector.extract_strided_slice %52 {offsets = [8, 0], sizes = [8, 128], strides = [1, 1]} : vector<16x128xf32> to vector<8x128xf32>
    %58 = arith.mulf %57, %51 : vector<8x128xf32>
    %cst_15 = arith.constant dense<0.000000e+00> : vector<128xf32>
    %59 = vector.multi_reduction <add>, %58, %cst_15 [0] : vector<8x128xf32> to vector<128xf32>
    %60 = vector.shape_cast %59 : vector<128xf32> to vector<1x128xf32>
    %61 = tpu.concatenate %56, %60 in 0 : vector<1x128xf32>, vector<1x128xf32> -> vector<2x128xf32>
    %62 = vector.extract_strided_slice %61 {offsets = [1, 0], sizes = [1, 128], strides = [1, 1]} : vector<2x128xf32> to vector<1x128xf32>
    %63 = vector.extract_strided_slice %61 {offsets = [0, 0], sizes = [1, 128], strides = [1, 1]} : vector<2x128xf32> to vector<1x128xf32>
    %64 = arith.subf %62, %63 : vector<1x128xf32>
    %c0_16 = arith.constant 0 : index
    %c0_17 = arith.constant 0 : index
    %c0_18 = arith.constant 0 : index
    %65 = vector.load %arg4[%c0_16, %c0_17, %c0_18] : memref<1x1x128xf32, #tpu.memory_space<vmem>>, vector<1x1x128xf32>
    %66 = vector.shape_cast %65 : vector<1x1x128xf32> to vector<1x128xf32>
    %67 = vector.shape_cast %64 : vector<1x128xf32> to vector<1x1x128xf32>
    tpu.vector_store %arg4[%c0_16, %c0_17, %c0_18], %67 {strides = array<i32>} : memref<1x1x128xf32, #tpu.memory_space<vmem>>, vector<1x1x128xf32>,
    return
  }
  func.func @transform_0(%arg0: i32, %arg1: i32) -> (i32, i32, i32) {
    %c0_i32 = arith.constant 0 : i32
    %c0_i32_0 = arith.constant 0 : i32
    %c0_i32_1 = arith.constant 0 : i32
    return %arg0, %c0_i32, %c0_i32_0 : i32, i32, i32
  }
  func.func @transform_1(%arg0: i32, %arg1: i32) -> (i32, i32, i32) {
    %c0_i32 = arith.constant 0 : i32
    %c0_i32_0 = arith.constant 0 : i32
    return %arg0, %c0_i32, %arg1 : i32, i32, i32
  }
  func.func @transform_2(%arg0: i32, %arg1: i32) -> (i32, i32, i32) {
    %c0_i32 = arith.constant 0 : i32
    %c0_i32_0 = arith.constant 0 : i32
    return %arg0, %c0_i32, %arg1 : i32, i32, i32
  }
}

</mosaic_0001>

<llo_original>
// kernel: tpu_custom_call.1
$region0: #{tpu_custom_call.1}
  #allocation0 [shape = 'u32[]', space=smem, size = 0x4, offset = 0x4, fixed_abs, tag = 'smem constant byte address 0x4 - core index']
  #allocation1 [shape = 'u32[144,128]{1,0:T(1,128)}', space=vmem, size = 0x12000, scoped, tag = 'internal scratch']
  %s0 = inlined_call_operand.vmem [shape: f32[2,16,8], index: 0, kind: input, shape index: {}]
  %s1 = inlined_call_operand.vmem [shape: f32[2,2,128], index: 1, kind: input, shape index: {}]
  %s2 = inlined_call_operand.hbm [shape: f32[2,1,128], index: 2, kind: output, shape index: {}]
  %s3 = sld [smem:[#allocation0]]
  $region41: #{tpu_custom_call.1} parent=0
    _
  %s5 = ssub.s32 1, %s3
  %s6 = scalar_select 0, %s5, %s3
  $region1: #{tpu_custom_call.1} parent=0
    #allocation2 [shape = 'u8[1024]{0}', space=vmem, size = 0x400, scoped, tag = 'output window, operand 0']
    #allocation3 [shape = 's32[2]{0}', space=sflag, size = 0x8, scoped, tag = 'scoped memory for tpu_custom_call.1']
    %7 = vsyncpa [#allocation3], 0
    %s8 = scalar_lea.sflag [#allocation3], 1
    %9 = vsyncpa %s8, 0
    loop: start=0, step=1, limit=4
    $region2: #{tpu_custom_call.1} parent=1 // loop_pre_header
      _
    $region3: #{tpu_custom_call.1} parent=1 // loop_header
      %s11 = sphi 0, %s15
      %p12 = scmp.ge.s32.totalorder %s11, 4
      %s18 = sphi 0, %s30
      %s19 = sphi 0, %s26
      %s20 = sphi 0, %s18
      %s21 = sphi 0, %s19
      %s22 = sphi 0, %s20
      %s23 = sphi 0, %s21
      %s33 = sphi 0, %s35
      %s36 = sphi 0, %s33
      %s37 = sphi 0, %s36
      %s53 = sphi 0, %s37
      %s61 = sphi 0, %s63
      %s64 = sphi 0, %s61
      %s65 = sphi 0, %s64
      %s81 = sphi 0, %s65
      %s89 = sphi 0, %s91
      %s92 = sphi 0, %s89
      %s93 = sphi 0, %s92
      %s109 = sphi 0, %s93
    $region4: #{tpu_custom_call.1} parent=1 // loop_header_branch
      %14 = sbr.rel (%p12) target = $region8
    $region5: #{tpu_custom_call.1} parent=1 // loop_body
      %s16 = ssub.s32 %s11, 1
      %s17 = ssub.s32 %s11, 2
      %s24 = sadd.s32 1, %s19
      %p25 = scmp.ge.s32.totalorder %s24, 1
      %s26 = scalar_select %p25, 0, %s24
      %s27 = sadd.s32 1, %s18
      %s28 = scalar_select %p25, %s27, %s18
      %p29 = scmp.ge.s32.totalorder %s28, 2
      %s30 = scalar_select %p29, 0, %s28
      %s31 = ssub.s32 %s18, %s30
      %p32 = scmp.eq.s32.totalorder %s31, 0
      %s34 = sadd.s32 %s33, 1
      %s35 = scalar_select %p32, %s33, %s34
      %p38 = pneg %p32
      %p39 = scmp.eq.s32.totalorder %s11, 1
      %p40 = por %p38, %p39
      %p41 = scmp.ne.s32.totalorder %s33, %s36
      %p42 = scmp.eq.s32.totalorder %s11, 0
      %p43 = por %p41, %p42
      %p44 = scmp.ne.s32.totalorder %s33, %s36
      %p45 = scmp.eq.s32.totalorder %s16, 1
      %p46 = por %p44, %p45
      %p47 = scmp.ne.s32.totalorder %s36, %s37
      %p48 = scmp.eq.s32.totalorder %s16, 0
      %p49 = por %p47, %p48
      %p50 = scmp.ne.s32.totalorder %s36, %s37
      %p51 = scmp.eq.s32.totalorder %s17, 1
      %p52 = por %p50, %p51
      %p54 = scmp.ne.s32.totalorder %s37, %s53
      %p55 = scmp.eq.s32.totalorder %s17, 0
      %p56 = por %p54, %p55
      %s57 = ssub.s32 %s18, %s30
      %s58 = ssub.s32 %s19, %s26
      %s59 = sor.u32 %s57, %s58
      %p60 = scmp.eq.s32.totalorder %s59, 0
      %s62 = sadd.s32 %s61, 1
      %s63 = scalar_select %p60, %s61, %s62
      %p66 = pneg %p60
      %p67 = scmp.eq.s32.totalorder %s11, 1
      %p68 = por %p66, %p67
      %p69 = scmp.ne.s32.totalorder %s61, %s64
      %p70 = scmp.eq.s32.totalorder %s11, 0
      %p71 = por %p69, %p70
      %p72 = scmp.ne.s32.totalorder %s61, %s64
      %p73 = scmp.eq.s32.totalorder %s16, 1
      %p74 = por %p72, %p73
      %p75 = scmp.ne.s32.totalorder %s64, %s65
      %p76 = scmp.eq.s32.totalorder %s16, 0
      %p77 = por %p75, %p76
      %p78 = scmp.ne.s32.totalorder %s64, %s65
      %p79 = scmp.eq.s32.totalorder %s17, 1
      %p80 = por %p78, %p79
      %p82 = scmp.ne.s32.totalorder %s65, %s81
      %p83 = scmp.eq.s32.totalorder %s17, 0
      %p84 = por %p82, %p83
      %s85 = ssub.s32 %s18, %s30
      %s86 = ssub.s32 %s19, %s26
      %s87 = sor.u32 %s85, %s86
      %p88 = scmp.eq.s32.totalorder %s87, 0
      %s90 = sadd.s32 %s89, 1
      %s91 = scalar_select %p88, %s89, %s90
      %p94 = pneg %p88
      %p95 = scmp.eq.s32.totalorder %s11, 1
      %p96 = por %p94, %p95
      %p97 = scmp.ne.s32.totalorder %s89, %s92
      %p98 = scmp.eq.s32.totalorder %s11, 0
      %p99 = por %p97, %p98
      %p100 = scmp.ne.s32.totalorder %s89, %s92
      %p101 = scmp.eq.s32.totalorder %s16, 1
      %p102 = por %p100, %p101
      %p103 = scmp.ne.s32.totalorder %s92, %s93
      %p104 = scmp.eq.s32.totalorder %s16, 0
      %p105 = por %p103, %p104
      %p106 = scmp.ne.s32.totalorder %s92, %s93
      %p107 = scmp.eq.s32.totalorder %s17, 1
      %p108 = por %p106, %p107
      %p110 = scmp.ne.s32.totalorder %s93, %s109
      %p111 = scmp.eq.s32.totalorder %s17, 0
      %p112 = por %p110, %p111
      %p113 = scmp.le.s32.totalorder 1, %s11
      %p114 = scmp.lt.s32.totalorder %s11, 3
      %p115 = pnand %p113, %p114
      %p116 = pneg %p115
      // Predicated region
      $region9: #{tpu_custom_call.1} parent=5 // pred_check
        _
      $region10: #{tpu_custom_call.1} parent=5 // pred_check_branch
        %118 = sbr.rel (%p115) target = $region12
      $region11: #{tpu_custom_call.1} parent=5 // pred_region
        %s119 = ssub.s32 %s11, 1
      $region12: #{tpu_custom_call.1} parent=5 // pred_fallthru
        _
      %p120 = scmp.lt.s32.totalorder %s11, 2
      // Predicated region
      $region13: #{tpu_custom_call.1} parent=5 // pred_check
        %p121 = pneg %p120
      $region14: #{tpu_custom_call.1} parent=5 // pred_check_branch
        %123 = sbr.rel (%p121) target = $region16
      $region15: #{tpu_custom_call.1} parent=5 // pred_region
        // Predicated region
        $region17: #{tpu_custom_call.1} parent=15 // pred_check
          %p124 = pneg %p43
        $region18: #{tpu_custom_call.1} parent=15 // pred_check_branch
          %126 = sbr.rel (%p124) target = $region20
        $region19: #{tpu_custom_call.1} parent=15 // pred_region
          %p127 = scmp.lt.s32.totalorder %s18, 1
          %s128 = scalar_select %p127, %s18, 1
          %s129 = smul.addr %s128, 2
          %s130 = smul.addr %s129, 8
          %s131 = scalar_lea.vmem %s0, %s130
        $region20: #{tpu_custom_call.1} parent=15 // pred_fallthru
          _
        // Predicated region
        $region21: #{tpu_custom_call.1} parent=15 // pred_check
          %p132 = pneg %p71
        $region22: #{tpu_custom_call.1} parent=15 // pred_check_branch
          %134 = sbr.rel (%p132) target = $region24
        $region23: #{tpu_custom_call.1} parent=15 // pred_region
          %p135 = scmp.lt.s32.totalorder %s18, 1
          %s136 = scalar_select %p135, %s18, 1
          %p137 = scmp.lt.s32.totalorder %s19, 0
          %s138 = scalar_select %p137, %s19, 0
          %s139 = sadd.s32 %s138, %s136
          %s140 = smul.addr %s139, 2
          %s141 = scalar_lea.vmem %s1, %s140
        $region24: #{tpu_custom_call.1} parent=15 // pred_fallthru
          _
      $region16: #{tpu_custom_call.1} parent=5 // pred_fallthru
        _
      %p142 = scmp.le.s32.totalorder 1, %s11
      %p143 = scmp.lt.s32.totalorder %s11, 3
      %p144 = pnand %p142, %p143
      %p145 = pneg %p144
      // Predicated region
      $region25: #{tpu_custom_call.1} parent=5 // pred_check
        _
      $region26: #{tpu_custom_call.1} parent=5 // pred_check_branch
        %147 = sbr.rel (%p144) target = $region28
      $region27: #{tpu_custom_call.1} parent=5 // pred_region
        %s148 = ssub.s32 %s11, 1
        %p149 = scmp.lt.s32.totalorder %s20, 1
        %s150 = scalar_select %p149, %s20, 1
        %s151 = smul.addr %s150, 2
        %s152 = smul.addr %s151, 8
        %s153 = scalar_lea.vmem %s0, %s152
        %p154 = pneg %p49
        %p155 = pneg %p46
        %p156 = scmp.lt.s32.totalorder %s20, 1
        %s157 = scalar_select %p156, %s20, 1
        %p158 = scmp.lt.s32.totalorder %s21, 0
        %s159 = scalar_select %p158, %s21, 0
        %s160 = sadd.s32 %s159, %s157
        %s161 = smul.addr %s160, 2
        %s162 = scalar_lea.vmem %s1, %s161
        %p163 = pneg %p77
        %p164 = pneg %p74
        %p165 = pneg %p105
        %p166 = pneg %p102
        %s167 = sand.u32 %s92, 1
        %s168 = scalar_lea.sflag [#allocation3], %s167
        %s169 = sand.u32 %s92, 1
        %s170 = scalar_lea.vmem [#allocation2], %s169
        %p171 = scmp.lt.s32.totalorder %s20, 1
        %s172 = scalar_select %p171, %s20, 1
        %s173 = smul.addr %s172, 2
        %s174 = smul.addr %s173, 8
        %s175 = scalar_lea.vmem %s0, %s174
        %p176 = scmp.lt.s32.totalorder %s20, 1
        %s177 = scalar_select %p176, %s20, 1
        %p178 = scmp.lt.s32.totalorder %s21, 0
        %s179 = scalar_select %p178, %s21, 0
        %s180 = sadd.s32 %s179, %s177
        %s181 = smul.addr %s180, 2
        %s182 = scalar_lea.vmem %s1, %s181
        %v183 = vld [vmem:[%s182] sm:$0x3]
        %v184 = vld [vmem:[%s175] sm:$0xff]
        %v185 = vld [vmem:[%s175 + $0x8] sm:$0xff]
        %v186 = vmul.f32 %v183, 8.0
        %v187 = vsub.f32 %v186, 0.5
        %v188 = vfloor.f32 %v187
        %v189 = vsub.f32 %v187, %v188
        %v190 = vcvt.f32.s32.to.zero.pseudo %v188
        %v191 = vlaneseq
        %v192 = vshrl.u32 %v191, 7
        %v193 = vlaneseq
        %v194 = vshrl.u32 %v193, 7
        %v195 = vsub.s32 0, %v194
        %v196 = vrot.slane %v190, %v195
        %vm197 = vcmp.eq.s32.totalorder %v192, %v196
        %v198 = vsub.f32 1.0, %v189
        %v199 = vadd.s32 %v190, 1
        %v200 = vlaneseq
        %v201 = vshrl.u32 %v200, 7
        %v202 = vsub.s32 0, %v201
        %v203 = vrot.slane %v199, %v202
        %vm204 = vcmp.eq.s32.totalorder %v192, %v203
        %v205 = vlaneseq
        %v206 = vshrl.u32 %v205, 7
        %v207 = vsub.s32 0, %v206
        %v208 = vrot.slane %v189, %v207
        %v209 = vsel %vm204, %v208, 0.0
        %v210 = vlaneseq
        %v211 = vshrl.u32 %v210, 7
        %v212 = vsub.s32 0, %v211
        %v213 = vrot.slane %v198, %v212
        %v214 = vsel %vm197, %v213, %v209
        %v215 = vlaneseq
        %v216 = vshrl.u32 %v215, 7
        %v217 = vsub.s32 1, %v216
        %v218 = vrot.slane %v190, %v217
        %vm219 = vcmp.eq.s32.totalorder %v192, %v218
        %v220 = vlaneseq
        %v221 = vshrl.u32 %v220, 7
        %v222 = vsub.s32 1, %v221
        %v223 = vrot.slane %v199, %v222
        %vm224 = vcmp.eq.s32.totalorder %v192, %v223
        %v225 = vlaneseq
        %v226 = vshrl.u32 %v225, 7
        %v227 = vsub.s32 1, %v226
        %v228 = vrot.slane %v189, %v227
        %v229 = vsel %vm224, %v228, 0.0
        %v230 = vlaneseq
        %v231 = vshrl.u32 %v230, 7
        %v232 = vsub.s32 1, %v231
        %v233 = vrot.slane %v198, %v232
        %v234 = vsel %vm219, %v233, %v229
        %vm235 = vcmask 64512
        %v237 = vsel %vm235, %v184, 0
        %v240 = vsel %vm235, %v185, 0
        %242 = vmatprep.subr.mxu0 0.0
        %243 = vmatpush1.msra.mxu0 %v214
        %244 = vmatprep.subr.mxu0 0.0
        %245 = vmatpush1.msra.mxu0 0.0
        %246 = vmatprep.subr.mxu0 0.0
        %247 = vmatpush1.msra.mxu0 0.0
        %248 = vmatprep.subr.mxu0 0.0
        %249 = vmatpush1.msra.mxu0 0.0
        %250 = vmatprep.subr.mxu0 0.0
        %251 = vmatpush1.msra.mxu0 0.0
        %252 = vmatprep.subr.mxu0 0.0
        %253 = vmatpush1.msra.mxu0 0.0
        %254 = vmatprep.subr.mxu0 0.0
        %255 = vmatpush1.msra.mxu0 0.0
        %256 = vmatprep.subr.mxu0 0.0
        %257 = vmatpush1.msra.mxu0 0.0
        %258 = vmatprep.subr.mxu0 0.0
        %259 = vmatpush1.msra.mxu0 0.0
        %260 = vmatprep.subr.mxu0 0.0
        %261 = vmatpush1.msra.mxu0 0.0
        %262 = vmatprep.subr.mxu0 0.0
        %263 = vmatpush1.msra.mxu0 0.0
        %264 = vmatprep.subr.mxu0 0.0
        %265 = vmatpush1.msra.mxu0 0.0
        %266 = vmatprep.subr.mxu0 0.0
        %267 = vmatpush1.msra.mxu0 0.0
        %268 = vmatprep.subr.mxu0 0.0
        %269 = vmatpush1.msra.mxu0 0.0
        %270 = vmatprep.subr.mxu0 0.0
        %271 = vmatpush1.msra.mxu0 0.0
        %272 = vmatprep.subr.mxu0 0.0
        %273 = vmatpush1.msra.mxu0 0.0
        %274 = vmatprep.subr.mxu0 0.0
        %275 = vmatpush1.msra.mxu0 0.0
        %276 = vmatprep.subr.mxu0 0.0
        %277 = vmatpush1.msra.mxu0 0.0
        %278 = vmatprep.subr.mxu0 0.0
        %279 = vmatpush1.msra.mxu0 0.0
        %280 = vmatprep.subr.mxu0 0.0
        %281 = vmatpush1.msra.mxu0 0.0
        %282 = vmatprep.subr.mxu0 0.0
        %283 = vmatpush1.msra.mxu0 0.0
        %284 = vmatprep.subr.mxu0 0.0
        %285 = vmatpush1.msra.mxu0 0.0
        %286 = vmatprep.subr.mxu0 0.0
        %287 = vmatpush1.msra.mxu0 0.0
        %288 = vmatprep.subr.mxu0 0.0
        %289 = vmatpush1.msra.mxu0 0.0
        %290 = vmatprep.subr.mxu0 0.0
        %291 = vmatpush1.msra.mxu0 0.0
        %292 = vmatprep.subr.mxu0 0.0
        %293 = vmatpush1.msra.mxu0 0.0
        %294 = vmatprep.subr.mxu0 0.0
        %295 = vmatpush1.msra.mxu0 0.0
        %296 = vmatprep.subr.mxu0 0.0
        %297 = vmatpush1.msra.mxu0 0.0
        %298 = vmatprep.subr.mxu0 0.0
        %299 = vmatpush1.msra.mxu0 0.0
        %300 = vmatprep.subr.mxu0 0.0
        %301 = vmatpush1.msra.mxu0 0.0
        %302 = vmatprep.subr.mxu0 0.0
        %303 = vmatpush1.msra.mxu0 0.0
        %304 = vmatprep.subr.mxu0 0.0
        %305 = vmatpush1.msra.mxu0 0.0
        %306 = vmatprep.mubr.f32.mxu0 0.0
        %307 = vmatmul.mubr.f32.gmra.mrb[0].mxu0 %v237
        %v308 = vpop.f32.mrb[0].mxu0
        %v309 = vadd.f32 0.0, %v308
        %v310 = vpop.f32.mrb[0].mxu0
        %311 = vmatprep.mubr.f32.mxu0 0.0
        %312 = vmatmul.mubr.f32.gmra.mrb[0].mxu0 %v240
        %v313 = vpop.f32.mrb[0].mxu0
        %v314 = vadd.f32 0.0, %v313
        %v315 = vpop.f32.mrb[0].mxu0
        %316 = vdwg.mxu0
        %v317 = vmul.f32 %v309, %v234
        %v318 = vrot.slane %v317, 4
        %v319 = vadd.f32 %v317, %v318
        %v320 = vrot.slane %v319, 2
        %v321 = vadd.f32 %v319, %v320
        %v322 = vrot.slane %v321, 1
        %v323 = vadd.f32 %v321, %v322
        %v324 = vmul.f32 %v314, %v234
        %v325 = vrot.slane %v324, 4
        %v326 = vadd.f32 %v324, %v325
        %v327 = vrot.slane %v326, 2
        %v328 = vadd.f32 %v326, %v327
        %v329 = vrot.slane %v328, 1
        %v330 = vadd.f32 %v328, %v329
        %vm331 = vcmask 1040384
        %v332 = vsel %vm331, %v323, %v330
        %v334 = vrot.slane %v332, 7
        %v336 = vsub.f32 %v332, %v334
        %337 = vst [vmem:[%s170 - $0x1] sm:$0x2] %v336
        %s338 = sand.u32 %s92, 1
        %s339 = scalar_lea.sflag [#allocation3], %s338
        %s340 = sand.u32 %s92, 1
        %s341 = scalar_lea.vmem [#allocation2], %s340
        // Predicated region
        $region29: #{tpu_custom_call.1} parent=27 // pred_check
          %p342 = pneg %p102
        $region30: #{tpu_custom_call.1} parent=27 // pred_check_branch
          %344 = sbr.rel (%p342) target = $region32
        $region31: #{tpu_custom_call.1} parent=27 // pred_region
          %s346 = ssub.s32 16, 16
          %347 = vsyncadd %s339, %s346
          %s348 = sadd.s32 %s21, %s20
          %s349 = smul.addr %s348, 16
          %s350 = scalar_lea.hbm %s2, %s349
          %s352 = sshll.u32 %s341, 4
          %s353 = int_to_ptr.vmem [resolvable:$true] %s352
          %355 = dma.vmem_to_hbm [thread:$0]  %s353, 16, %s350, %s339
        $region32: #{tpu_custom_call.1} parent=27 // pred_fallthru
          _
      $region28: #{tpu_custom_call.1} parent=5 // pred_fallthru
        _
      %p356 = scmp.le.s32.totalorder 2, %s11
      // Predicated region
      $region33: #{tpu_custom_call.1} parent=5 // pred_check
        %p357 = pneg %p356
      $region34: #{tpu_custom_call.1} parent=5 // pred_check_branch
        %359 = sbr.rel (%p357) target = $region36
      $region35: #{tpu_custom_call.1} parent=5 // pred_region
        %s360 = ssub.s32 %s11, 2
        // Predicated region
        $region37: #{tpu_custom_call.1} parent=35 // pred_check
          %p361 = pneg %p108
        $region38: #{tpu_custom_call.1} parent=35 // pred_check_branch
          %363 = sbr.rel (%p361) target = $region40
        $region39: #{tpu_custom_call.1} parent=35 // pred_region
          %s364 = sand.u32 %s93, 1
          %s365 = scalar_lea.sflag [#allocation3], %s364
          %s366 = sand.u32 %s93, 1
          %s367 = scalar_lea.vmem [#allocation2], %s366
          %368 = dma.done %s365, 16
        $region40: #{tpu_custom_call.1} parent=35 // pred_fallthru
          _
      $region36: #{tpu_custom_call.1} parent=5 // pred_fallthru
        _
    $region6: #{tpu_custom_call.1} parent=1 // loop_footer
      %s15 = sadd.s32 1, %s11
    $region7: #{tpu_custom_call.1} parent=1 // loop_footer_branch
      %10 = sbr.rel target = $region3
    $region8: #{tpu_custom_call.1} parent=1 // loop_exit
      _
    %369 = vsyncpa [#allocation3], 1
    %s370 = scalar_lea.sflag [#allocation3], 1
    %371 = vsyncpa %s370, 1

</llo_original>
